<compile_context>
chip_gen: v5e
topology: v5e:2x2
jax: 0.10.0
libtpu: 0.0.40
codegen_flags: <defaults>
</compile_context>

<pallas_src>
import numpy as np
import jax
import jax.numpy as jnp
from jax.experimental import pallas as pl
from jax.experimental.pallas import tpu as pltpu

LANE = 128             # lane-dense width
PACK_ROWS = 4          # packed input rows (log_vars, losses, wmask, one-hot)
TOTAL_LANE = LANE - 1  # spare lane carrying the scalar total loss


def _make_balancer_kernel(min_weight: float, max_weight: float):
    def kernel(packed_ref, out_ref):
        log_vars = packed_ref[0:1, :]   # (1, LANE), pre-masked by `active`
        losses = packed_ref[1:2, :]     # (1, LANE), zero where missing/padded
        wmask = packed_ref[2:3, :]      # (1, LANE), active & present
        onehot = packed_ref[3:4, :]     # (1, LANE), 1.0 at lane TOTAL_LANE

        # precision_i = clamp(exp(-log_var_i), min_weight, max_weight)
        precision = jnp.clip(jnp.exp(-log_vars), min_weight, max_weight)

        # total = sum_i precision_i * loss_i + log_var_i
        # (masked lanes contribute exactly 0; missing-but-considered lanes
        #  contribute log_var_i, matching the PyTorch forward)
        total = jnp.sum(precision * losses + log_vars)

        # weights at lane TOTAL_LANE are guaranteed 0 (wmask is 0 there),
        # so a single add places the scalar total in the spare lane.
        out_ref[...] = wmask * precision + total * onehot

    return kernel


def _make_balance_fn(num_objectives: int, present: tuple,
                     min_weight: float, max_weight: float):
    """Build a jitted balance fn for one loss-dict signature."""
    n = num_objectives
    n_considered = len(present)                 # <= n
    assert n_considered <= n < TOTAL_LANE

    active_np = np.zeros((LANE,), np.float32)
    active_np[:n_considered] = 1.0
    wmask_np = np.zeros((LANE,), np.float32)
    for i, p in enumerate(present):
        if p:
            wmask_np[i] = 1.0
    onehot_np = np.zeros((LANE,), np.float32)
    onehot_np[TOTAL_LANE] = 1.0

    call = pl.pallas_call(
        _make_balancer_kernel(min_weight, max_weight),
        out_shape=jax.ShapeDtypeStruct((1, LANE), jnp.float32),
        in_specs=[pl.BlockSpec(memory_space=pltpu.MemorySpace.VMEM)],
        out_specs=pl.BlockSpec(memory_space=pltpu.MemorySpace.VMEM),
    )

    @jax.jit
    def balance(log_vars, loss_arr):
        # loss_arr: (n_considered,) f32, zeros where missing (built host-side)
        lv_row = jnp.zeros((LANE,), jnp.float32).at[:n].set(
            jnp.asarray(log_vars, jnp.float32))
        lv_row = lv_row * jnp.asarray(active_np)      # zero non-considered lanes

        loss_row = jnp.zeros((LANE,), jnp.float32).at[:n_considered].set(
            jnp.asarray(loss_arr, jnp.float32))

        packed = jnp.stack([lv_row, loss_row,
                            jnp.asarray(wmask_np), jnp.asarray(onehot_np)])

        out = call(packed)                            # (1, LANE)
        total = out[0, TOTAL_LANE]                    # fused slice inside jit
        return total, out

    return balance


class MultiObjectiveLossBalancer:
    """JAX/Pallas port of the PyTorch MultiObjectiveLossBalancer forward pass."""

    objective_names = ['reconstruction', 'kl_divergence', 'adversarial_gen',
                       'adversarial_disc', 'feature_matching', 'musical_constraints']

    def __init__(self, num_objectives: int = 6, init_log_var: float = 0.0,
                 min_weight: float = 1e-4, max_weight: float = 100.0):
        assert num_objectives < TOTAL_LANE
        self.num_objectives = num_objectives
        self.min_weight = min_weight
        self.max_weight = max_weight
        # deterministic parameter init (same as torch.full((n,), init_log_var))
        self.log_vars = jnp.full((num_objectives,), init_log_var, dtype=jnp.float32)
        self._fn_cache = {}

    def __call__(self, losses):
        considered = self.objective_names[:len(losses)][:self.num_objectives]
        present = tuple(name in losses for name in considered)

        fn = self._fn_cache.get(present)
        if fn is None:
            fn = _make_balance_fn(self.num_objectives, present,
                                  self.min_weight, self.max_weight)
            self._fn_cache[present] = fn

        # Dense (n_considered,) loss array with zeros at missing names
        # (missing-ness is static per cached signature).
        vals = [losses.get(name, 0.0) for name in considered]
        if vals and any(isinstance(v, jax.Array) for v in vals):
            loss_arr = jnp.stack([jnp.asarray(v, jnp.float32).reshape(())
                                  for v in vals])
        else:
            loss_arr = np.asarray([float(v) for v in vals], dtype=np.float32)

        total, out_row = fn(self.log_vars, loss_arr)

        row = np.asarray(jax.device_get(out_row))[0]   # single host sync
        weights = {name: float(row[i]) for i, name in enumerate(considered)}
        return total, weights

    def get_weights(self):
        prec = jnp.clip(jnp.exp(-self.log_vars), self.min_weight, self.max_weight)
        prec = jax.device_get(prec)
        return {name: float(prec[i])
                for i, name in enumerate(self.objective_names[:self.num_objectives])}


if __name__ == "__main__":
    key = jax.random.PRNGKey(0)
    k1, k2 = jax.random.split(key)

    balancer = MultiObjectiveLossBalancer(num_objectives=6, init_log_var=0.0)
    # non-trivial log_vars to exercise exp/clip/weight paths
    balancer.log_vars = jax.random.normal(k1, (6,), dtype=jnp.float32) * 0.5
    vals = jax.random.uniform(k2, (6,), dtype=jnp.float32) * 2.0
    names = MultiObjectiveLossBalancer.objective_names

    # Case 1: all 6 objectives present.
    losses = {name: vals[i] for i, name in enumerate(names)}
    total_loss, weights = balancer(losses)
    total_loss = jax.block_until_ready(total_loss)

    prec = jnp.clip(jnp.exp(-balancer.log_vars), 1e-4, 100.0)
    ref_total = jnp.sum(prec * vals + balancer.log_vars)
    assert jnp.allclose(total_loss, ref_total, rtol=1e-4, atol=1e-5), (
        total_loss, ref_total)
    ref_w = jax.device_get(prec)
    for i, name in enumerate(names):
        assert abs(weights[name] - float(ref_w[i])) <= 1e-4 * max(1.0, abs(float(ref_w[i])))

    # Case 2: partial dict (drop 'feature_matching'); first 5 names considered,
    # the missing one contributes only its log_var and reports weight 0.0.
    losses2 = {name: vals[i] for i, name in enumerate(names)
               if name != 'feature_matching'}
    total2, weights2 = balancer(losses2)
    total2 = jax.block_until_ready(total2)

    lv = balancer.log_vars
    ref2 = jnp.float32(0.0)
    for i, name in enumerate(names[:5]):
        li = vals[i] if name in losses2 else jnp.float32(0.0)
        ref2 = ref2 + jnp.clip(jnp.exp(-lv[i]), 1e-4, 100.0) * li + lv[i]
    assert jnp.allclose(total2, ref2, rtol=1e-4, atol=1e-5), (total2, ref2)
    assert weights2['feature_matching'] == 0.0

    print("KERNEL_OK")
</pallas_src>

<mosaic_0001>
module attributes {stable_mosaic.version = 11 : i64} {
  func.func @kernel(%arg0: memref<4x128xf32, #tpu.memory_space<vmem>>, %arg1: memref<1x128xf32, #tpu.memory_space<vmem>>) attributes {dimension_semantics = [], scalar_prefetch = 0 : i64, scratch_operands = 0 : i64, tpu.core_type = #tpu.core_type<tc>} {
    %c0 = arith.constant 0 : index
    %c0_0 = arith.constant 0 : index
    %0 = vector.load %arg0[%c0, %c0_0] : memref<4x128xf32, #tpu.memory_space<vmem>>, vector<1x128xf32>
    %c1 = arith.constant 1 : index
    %c0_1 = arith.constant 0 : index
    %1 = vector.load %arg0[%c1, %c0_1] : memref<4x128xf32, #tpu.memory_space<vmem>>, vector<1x128xf32>
    %c2 = arith.constant 2 : index
    %c0_2 = arith.constant 0 : index
    %2 = vector.load %arg0[%c2, %c0_2] : memref<4x128xf32, #tpu.memory_space<vmem>>, vector<1x128xf32>
    %c3 = arith.constant 3 : index
    %c0_3 = arith.constant 0 : index
    %3 = vector.load %arg0[%c3, %c0_3] : memref<4x128xf32, #tpu.memory_space<vmem>>, vector<1x128xf32>
    %cst = arith.constant 0.000000e+00 : f32
    %4 = vector.broadcast %cst : f32 to vector<1x128xf32>
    %5 = arith.subf %4, %0 : vector<1x128xf32>
    %6 = math.exp %5 : vector<1x128xf32>
    %cst_4 = arith.constant 9.99999974E-5 : f32
    %cst_5 = arith.constant 1.000000e+02 : f32
    %7 = vector.broadcast %cst_4 : f32 to vector<1x128xf32>
    %8 = arith.maximumf %7, %6 : vector<1x128xf32>
    %9 = vector.broadcast %cst_5 : f32 to vector<1x128xf32>
    %10 = arith.minimumf %9, %8 : vector<1x128xf32>
    %11 = arith.mulf %10, %1 : vector<1x128xf32>
    %12 = arith.addf %11, %0 : vector<1x128xf32>
    %13 = vector.shape_cast %12 : vector<1x128xf32> to vector<1x1x128xf32>
    %cst_6 = arith.constant dense<0.000000e+00> : vector<1xf32>
    %14 = vector.multi_reduction <add>, %13, %cst_6 [1, 2] : vector<1x1x128xf32> to vector<1xf32>
    %15 = vector.shape_cast %14 : vector<1xf32> to vector<1x1x1xf32>
    %16 = vector.extract %15[0, 0, 0] : f32 from vector<1x1x1xf32>
    %17 = arith.mulf %2, %10 : vector<1x128xf32>
    %18 = vector.broadcast %16 : f32 to vector<1x128xf32>
    %19 = arith.mulf %18, %3 : vector<1x128xf32>
    %20 = arith.addf %17, %19 : vector<1x128xf32>
    %c0_7 = arith.constant 0 : index
    %c0_8 = arith.constant 0 : index
    %21 = vector.load %arg1[%c0_7, %c0_8] : memref<1x128xf32, #tpu.memory_space<vmem>>, vector<1x128xf32>
    tpu.vector_store %arg1[%c0_7, %c0_8], %20 {strides = array<i32>} : memref<1x128xf32, #tpu.memory_space<vmem>>, vector<1x128xf32>,
    return
  }
}

</mosaic_0001>

<llo_original>
// kernel: balance.1
$region0: #{balance.1}
  #allocation0 [shape = 'u32[]', space=smem, size = 0x4, offset = 0x4, fixed_abs, tag = 'smem constant byte address 0x4 - core index']
  #allocation1 [shape = 'u32[72,128]{1,0:T(1,128)}', space=vmem, size = 0x9000, scoped, tag = 'internal scratch']
  %s0 = inlined_call_operand.vmem [shape: f32[4,128], index: 0, kind: input, shape index: {}]
  %s1 = inlined_call_operand.vmem [shape: f32[1,128], index: 1, kind: output, shape index: {}]
  %s2 = sld [smem:[#allocation0]]
  $region14: #{balance.1} parent=0
    _
  %s4 = ssub.s32 1, %s2
  %s5 = scalar_select 0, %s4, %s2
  // Predicated region
  $region2: #{balance.1} parent=0 // pred_check
    _
  $region3: #{balance.1} parent=0 // pred_check_branch
    %7 = sbr.rel (0) target = $region5
  $region4: #{balance.1} parent=0 // pred_region
    _
  $region5: #{balance.1} parent=0 // pred_fallthru
    _
  %v8 = vld [vmem:[%s0] sm:$0x1]
  %v9 = vld [vmem:[%s0 + $0x1] sm:$0x1]
  %v10 = vld [vmem:[%s0 + $0x2] sm:$0x1]
  %v11 = vld [vmem:[%s0 + $0x3] sm:$0x1]
  %v12 = vsub.f32 0.0, %v8
  %v13 = vmul.f32 %v12, 1.442695
  %v14 = vpow.pop %v13
  %v15 = vmax.f32 %v14, 0.0001
  %v16 = vmin.f32 %v15, 100.0
  %v17 = vmul.f32 %v16, %v9
  %v18 = vadd.f32 %v17, %v8
  %vm19 = vcmask 1040384
  %v20 = vsel %vm19, %v18, 0.0
  %21 = vadd.xlane.f32.xlu0 %v20
  %v22 = vpop.xlane.xlu0 %21
  %v23 = vrot.slane %v22, 4
  %v24 = vadd.f32 %v22, %v23
  %v25 = vrot.slane %v24, 2
  %v26 = vadd.f32 %v24, %v25
  %v27 = vrot.slane %v26, 1
  %v28 = vadd.f32 %v26, %v27
  %s29 = vtos %v28
  %v30 = vmul.f32 %v10, %v16
  %v31 = vstv %s29
  %v32 = vmul.f32 %v31, %v11
  %v33 = vadd.f32 %v30, %v32
  %34 = vst [vmem:[%s1] sm:$0x1] %v33
  // Predicated region
  $region6: #{balance.1} parent=0 // pred_check
    _
  $region7: #{balance.1} parent=0 // pred_check_branch
    %36 = sbr.rel (0) target = $region9
  $region8: #{balance.1} parent=0 // pred_region
    _
  $region9: #{balance.1} parent=0 // pred_fallthru
    _
  // Predicated region
  $region10: #{balance.1} parent=0 // pred_check
    _
  $region11: #{balance.1} parent=0 // pred_check_branch
    %38 = sbr.rel (0) target = $region13
  $region12: #{balance.1} parent=0 // pred_region
    _
  $region13: #{balance.1} parent=0 // pred_fallthru
    _

</llo_original>
